<compile_context>
chip_gen: v7x
topology: tpu7x:2x2x1
jax: 0.10.0
libtpu: 0.0.40
codegen_flags: <defaults>
</compile_context>

<pallas_src>
import math

import jax
import jax.numpy as jnp
from jax.experimental import pallas as pl
from jax.experimental.pallas import tpu as pltpu

HIDDEN = 256
OUT_COLS = 8             # narrow fp32 output: q1 = col 0, q2 = col 1
MAX_BATCH_TILE = 1024    # per-step intermediates stay well under scoped VMEM
BATCH_GRAN = 16          # bf16 sublane packing granularity


def _round_up(x, m):
    return (x + m - 1) // m * m


def _choose_batch_tiling(batch):
    """Balanced batch tiling: minimize padding, cap tile size, and give the
    'parallel' batch axis >=2 grid steps when possible (v7x has 2 TensorCores)."""
    num_tiles = pl.cdiv(batch, MAX_BATCH_TILE)
    if batch > BATCH_GRAN:
        num_tiles = max(num_tiles, 2)
    tb = _round_up(pl.cdiv(batch, num_tiles), BATCH_GRAN)
    b_pad = tb * num_tiles
    return tb, b_pad


def _critic_kernel(sa_ref,
                   w14_ref, b14_ref,
                   w2_ref, b2_ref, w5_ref, b5_ref,
                   wh_ref, bh_ref,
                   out_ref):
    sa = sa_ref[...]                                     # (TB, in_dim) bf16

    # ---- fused layer 1 (both branches): [h | g] = relu(sa @ [W1|W4] + [b1|b4])
    pre = jnp.dot(sa, w14_ref[...],
                  preferred_element_type=jnp.float32) + b14_ref[...]
    hg = jnp.maximum(pre, 0.0).astype(jnp.bfloat16)      # (TB, 512) bf16
    h = hg[:, :HIDDEN]                                   # lane-aligned slices
    g = hg[:, HIDDEN:]

    # ---- layer 2: two independent 256x256 dots, bf16 straight out of the ReLU
    h2 = jnp.maximum(
        jnp.dot(h, w2_ref[...], preferred_element_type=jnp.float32) + b2_ref[...],
        0.0).astype(jnp.bfloat16)
    g2 = jnp.maximum(
        jnp.dot(g, w5_ref[...], preferred_element_type=jnp.float32) + b5_ref[...],
        0.0).astype(jnp.bfloat16)

    # ---- fused scalar heads: single (TB,512)@(512,8) dot (128-aligned concat)
    hg2 = jnp.concatenate([h2, g2], axis=1)              # (TB, 512) bf16
    out_ref[...] = (jnp.dot(hg2, wh_ref[...],
                            preferred_element_type=jnp.float32) + bh_ref[...])


def critic_forward(state, action, packed_params):
    """Pallas equivalent of Critic.forward -> (q1, q2), each of shape [B, 1]."""
    (w14, b14, w2, b2, w5, b5, wh, bh) = packed_params
    B, state_dim = state.shape
    action_dim = action.shape[1]
    in_dim = state_dim + action_dim

    # concat + bf16 cast once on the host side (negligible XLA work)
    sa = jnp.concatenate([state.astype(jnp.float32),
                          action.astype(jnp.float32)], axis=1).astype(jnp.bfloat16)

    tb, b_pad = _choose_batch_tiling(B)
    if b_pad != B:
        sa = jnp.pad(sa, ((0, b_pad - B), (0, 0)))
    grid = (b_pad // tb,)

    def const_spec(arr):
        return pl.BlockSpec(arr.shape, lambda i: (0, 0))

    flops = 2 * b_pad * (in_dim * 2 * HIDDEN          # fused layer 1
                         + 2 * HIDDEN * HIDDEN        # layer 2 (both branches)
                         + 2 * HIDDEN * OUT_COLS)     # fused heads
    bytes_accessed = (b_pad * in_dim * 2              # bf16 activations in
                      + b_pad * OUT_COLS * 4          # narrow fp32 output
                      + (in_dim * 2 * HIDDEN          # bf16 weights
                         + 2 * HIDDEN * HIDDEN
                         + 2 * HIDDEN * OUT_COLS) * 2
                      + (2 * HIDDEN + 2 * HIDDEN + OUT_COLS) * 4)   # fp32 biases

    out = pl.pallas_call(
        _critic_kernel,
        out_shape=jax.ShapeDtypeStruct((b_pad, OUT_COLS), jnp.float32),
        grid=grid,
        in_specs=[
            pl.BlockSpec((tb, in_dim), lambda i: (i, 0)),   # batch-tiled sa
            const_spec(w14), const_spec(b14),
            const_spec(w2), const_spec(b2),
            const_spec(w5), const_spec(b5),
            const_spec(wh), const_spec(bh),
        ],
        out_specs=pl.BlockSpec((tb, OUT_COLS), lambda i: (i, 0)),
        compiler_params=pltpu.CompilerParams(
            dimension_semantics=("parallel",),
            vmem_limit_bytes=32 * 1024 * 1024,
        ),
        cost_estimate=pl.CostEstimate(
            flops=flops, transcendentals=0, bytes_accessed=bytes_accessed),
    )(sa, w14, b14, w2, b2, w5, b5, wh, bh)

    q1 = out[:B, 0:1]
    q2 = out[:B, 1:2]
    return q1, q2


# ----------------------------------------------------------------------------
# Parameter handling
# ----------------------------------------------------------------------------
def init_raw_params(key, state_dim, action_dim):
    """Mimics nn.Linear default init (uniform +-1/sqrt(fan_in)).
    Weights stored as [in_features, out_features] (transpose of PyTorch)."""
    in_dim = state_dim + action_dim

    def linear(k, fan_in, fan_out):
        kw, kb = jax.random.split(k)
        bound = 1.0 / math.sqrt(fan_in)
        w = jax.random.uniform(kw, (fan_in, fan_out), jnp.float32, -bound, bound)
        b = jax.random.uniform(kb, (1, fan_out), jnp.float32, -bound, bound)
        return w, b

    keys = jax.random.split(key, 6)
    w1, b1 = linear(keys[0], in_dim, HIDDEN)
    w2, b2 = linear(keys[1], HIDDEN, HIDDEN)
    w3, b3 = linear(keys[2], HIDDEN, 1)
    w4, b4 = linear(keys[3], in_dim, HIDDEN)
    w5, b5 = linear(keys[4], HIDDEN, HIDDEN)
    w6, b6 = linear(keys[5], HIDDEN, 1)
    return (w1, b1, w2, b2, w3, b3, w4, b4, w5, b5, w6, b6)


def pack_params(raw):
    """Pack PyTorch-layout params into the fused kernel layout."""
    (w1, b1, w2, b2, w3, b3, w4, b4, w5, b5, w6, b6) = raw
    bf16 = jnp.bfloat16

    w14 = jnp.concatenate([w1, w4], axis=1).astype(bf16)     # [in_dim, 512]
    b14 = jnp.concatenate([b1, b4], axis=1)                  # [1, 512] fp32

    # stacked head weight: rows [0:256) = q1 head (col 0), rows [256:512) = q2 head (col 1)
    wh = (jnp.zeros((2 * HIDDEN, OUT_COLS), jnp.float32)
          .at[:HIDDEN, 0].set(w3.reshape(-1))
          .at[HIDDEN:, 1].set(w6.reshape(-1))).astype(bf16)
    bh = (jnp.zeros((1, OUT_COLS), jnp.float32)
          .at[0, 0].set(b3[0, 0]).at[0, 1].set(b6[0, 0]))

    return (w14, b14,
            w2.astype(bf16), b2, w5.astype(bf16), b5,
            wh, bh)


def critic_forward_ref(state, action, raw):
    """Plain-JAX reference mirroring the PyTorch forward (same bf16 weight
    precision as the kernel, fp32 accumulation)."""
    (w1, b1, w2, b2, w3, b3, w4, b4, w5, b5, w6, b6) = raw
    bf16 = jnp.bfloat16

    def lin(x, w, b):
        return jnp.dot(x.astype(bf16), w.astype(bf16),
                       preferred_element_type=jnp.float32) + b

    sa = jnp.concatenate([state, action], axis=1)
    h = jax.nn.relu(lin(sa, w1, b1))
    h = jax.nn.relu(lin(h, w2, b2))
    q1 = lin(h, w3, b3)
    g = jax.nn.relu(lin(sa, w4, b4))
    g = jax.nn.relu(lin(g, w5, b5))
    q2 = lin(g, w6, b6)
    return q1, q2


if __name__ == "__main__":
    key = jax.random.PRNGKey(0)
    k_params, k_state, k_action = jax.random.split(key, 3)

    batch = 8
    state_dim = 16
    action_dim = 8

    raw = init_raw_params(k_params, state_dim, action_dim)
    packed = pack_params(raw)

    state = jax.random.normal(k_state, (batch, state_dim), jnp.float32)
    action = jax.random.normal(k_action, (batch, action_dim), jnp.float32)

    q1, q2 = critic_forward(state, action, packed)
    q1 = jax.block_until_ready(q1)
    q2 = jax.block_until_ready(q2)

    q1_ref, q2_ref = critic_forward_ref(state, action, raw)
    assert q1.shape == (batch, 1) and q2.shape == (batch, 1)
    assert jnp.allclose(q1, q1_ref, atol=2e-3, rtol=2e-3)
    assert jnp.allclose(q2, q2_ref, atol=2e-3, rtol=2e-3)

    print("KERNEL_OK")
</pallas_src>

<mosaic_0001>
module attributes {stable_mosaic.version = 11 : i64} {
  func.func @_critic_kernel(%arg0: i32, %arg1: memref<16x24xbf16, #tpu.memory_space<vmem>>, %arg2: memref<24x512xbf16, #tpu.memory_space<vmem>>, %arg3: memref<1x512xf32, #tpu.memory_space<vmem>>, %arg4: memref<256x256xbf16, #tpu.memory_space<vmem>>, %arg5: memref<1x256xf32, #tpu.memory_space<vmem>>, %arg6: memref<256x256xbf16, #tpu.memory_space<vmem>>, %arg7: memref<1x256xf32, #tpu.memory_space<vmem>>, %arg8: memref<512x8xbf16, #tpu.memory_space<vmem>>, %arg9: memref<1x8xf32, #tpu.memory_space<vmem>>, %arg10: memref<16x8xf32, #tpu.memory_space<vmem>>) attributes {dimension_semantics = [#tpu.dimension_semantics<parallel>], iteration_bounds = array<i64: 1>, scalar_prefetch = 0 : i64, scratch_operands = 0 : i64, tpu.core_type = #tpu.core_type<tc>, window_params = [{transform_indices = @transform_0, window_bounds = array<i64: 16, 24>}, {pipeline_mode = #tpu.pipeline_mode<synchronous>, transform_indices = @transform_1, window_bounds = array<i64: 24, 512>}, {pipeline_mode = #tpu.pipeline_mode<synchronous>, transform_indices = @transform_2, window_bounds = array<i64: 1, 512>}, {pipeline_mode = #tpu.pipeline_mode<synchronous>, transform_indices = @transform_3, window_bounds = array<i64: 256, 256>}, {pipeline_mode = #tpu.pipeline_mode<synchronous>, transform_indices = @transform_4, window_bounds = array<i64: 1, 256>}, {pipeline_mode = #tpu.pipeline_mode<synchronous>, transform_indices = @transform_5, window_bounds = array<i64: 256, 256>}, {pipeline_mode = #tpu.pipeline_mode<synchronous>, transform_indices = @transform_6, window_bounds = array<i64: 1, 256>}, {pipeline_mode = #tpu.pipeline_mode<synchronous>, transform_indices = @transform_7, window_bounds = array<i64: 512, 8>}, {pipeline_mode = #tpu.pipeline_mode<synchronous>, transform_indices = @transform_8, window_bounds = array<i64: 1, 8>}, {transform_indices = @transform_9, window_bounds = array<i64: 16, 8>}]} {
    %c0 = arith.constant 0 : index
    %c0_0 = arith.constant 0 : index
    %0 = vector.load %arg1[%c0, %c0_0] : memref<16x24xbf16, #tpu.memory_space<vmem>>, vector<16x24xbf16>
    %c0_1 = arith.constant 0 : index
    %c0_2 = arith.constant 0 : index
    %1 = vector.load %arg2[%c0_1, %c0_2] : memref<24x512xbf16, #tpu.memory_space<vmem>>, vector<24x512xbf16>
    %cst = arith.constant dense<0.000000e+00> : vector<16x512xf32>
    %2 = tpu.matmul %0, %1, %cst {dimension_numbers = #tpu.dot_dimension_numbers<[1], [0], [0], [1], [0, 0, 1, 1], [], []>} : vector<16x24xbf16>, vector<24x512xbf16>, vector<16x512xf32> -> vector<16x512xf32>
    %c0_3 = arith.constant 0 : index
    %c0_4 = arith.constant 0 : index
    %3 = vector.load %arg3[%c0_3, %c0_4] : memref<1x512xf32, #tpu.memory_space<vmem>>, vector<1x512xf32>
    %4 = vector.broadcast %3 : vector<1x512xf32> to vector<16x512xf32>
    %5 = arith.addf %2, %4 : vector<16x512xf32>
    %cst_5 = arith.constant 0.000000e+00 : f32
    %6 = vector.broadcast %cst_5 : f32 to vector<16x512xf32>
    %7 = arith.maximumf %5, %6 : vector<16x512xf32>
    %8 = arith.truncf %7 : vector<16x512xf32> to vector<16x512xbf16>
    %9 = vector.extract_strided_slice %8 {offsets = [0, 0], sizes = [16, 256], strides = [1, 1]} : vector<16x512xbf16> to vector<16x256xbf16>
    %10 = vector.extract_strided_slice %8 {offsets = [0, 256], sizes = [16, 256], strides = [1, 1]} : vector<16x512xbf16> to vector<16x256xbf16>
    %c0_6 = arith.constant 0 : index
    %c0_7 = arith.constant 0 : index
    %11 = vector.load %arg4[%c0_6, %c0_7] : memref<256x256xbf16, #tpu.memory_space<vmem>>, vector<256x256xbf16>
    %cst_8 = arith.constant dense<0.000000e+00> : vector<16x256xf32>
    %12 = tpu.matmul %9, %11, %cst_8 {dimension_numbers = #tpu.dot_dimension_numbers<[1], [0], [0], [1], [0, 0, 1, 1], [], []>} : vector<16x256xbf16>, vector<256x256xbf16>, vector<16x256xf32> -> vector<16x256xf32>
    %c0_9 = arith.constant 0 : index
    %c0_10 = arith.constant 0 : index
    %13 = vector.load %arg5[%c0_9, %c0_10] : memref<1x256xf32, #tpu.memory_space<vmem>>, vector<1x256xf32>
    %14 = vector.broadcast %13 : vector<1x256xf32> to vector<16x256xf32>
    %15 = arith.addf %12, %14 : vector<16x256xf32>
    %cst_11 = arith.constant 0.000000e+00 : f32
    %16 = vector.broadcast %cst_11 : f32 to vector<16x256xf32>
    %17 = arith.maximumf %15, %16 : vector<16x256xf32>
    %18 = arith.truncf %17 : vector<16x256xf32> to vector<16x256xbf16>
    %c0_12 = arith.constant 0 : index
    %c0_13 = arith.constant 0 : index
    %19 = vector.load %arg6[%c0_12, %c0_13] : memref<256x256xbf16, #tpu.memory_space<vmem>>, vector<256x256xbf16>
    %cst_14 = arith.constant dense<0.000000e+00> : vector<16x256xf32>
    %20 = tpu.matmul %10, %19, %cst_14 {dimension_numbers = #tpu.dot_dimension_numbers<[1], [0], [0], [1], [0, 0, 1, 1], [], []>} : vector<16x256xbf16>, vector<256x256xbf16>, vector<16x256xf32> -> vector<16x256xf32>
    %c0_15 = arith.constant 0 : index
    %c0_16 = arith.constant 0 : index
    %21 = vector.load %arg7[%c0_15, %c0_16] : memref<1x256xf32, #tpu.memory_space<vmem>>, vector<1x256xf32>
    %22 = vector.broadcast %21 : vector<1x256xf32> to vector<16x256xf32>
    %23 = arith.addf %20, %22 : vector<16x256xf32>
    %cst_17 = arith.constant 0.000000e+00 : f32
    %24 = vector.broadcast %cst_17 : f32 to vector<16x256xf32>
    %25 = arith.maximumf %23, %24 : vector<16x256xf32>
    %26 = arith.truncf %25 : vector<16x256xf32> to vector<16x256xbf16>
    %27 = tpu.concatenate %18, %26 in 1 : vector<16x256xbf16>, vector<16x256xbf16> -> vector<16x512xbf16>
    %c0_18 = arith.constant 0 : index
    %c0_19 = arith.constant 0 : index
    %28 = vector.load %arg8[%c0_18, %c0_19] : memref<512x8xbf16, #tpu.memory_space<vmem>>, vector<512x8xbf16>
    %cst_20 = arith.constant dense<0.000000e+00> : vector<16x8xf32>
    %29 = tpu.matmul %27, %28, %cst_20 {dimension_numbers = #tpu.dot_dimension_numbers<[1], [0], [0], [1], [0, 0, 1, 1], [], []>} : vector<16x512xbf16>, vector<512x8xbf16>, vector<16x8xf32> -> vector<16x8xf32>
    %c0_21 = arith.constant 0 : index
    %c0_22 = arith.constant 0 : index
    %30 = vector.load %arg9[%c0_21, %c0_22] : memref<1x8xf32, #tpu.memory_space<vmem>>, vector<1x8xf32>
    %31 = vector.broadcast %30 : vector<1x8xf32> to vector<16x8xf32>
    %32 = arith.addf %29, %31 : vector<16x8xf32>
    %c0_23 = arith.constant 0 : index
    %c0_24 = arith.constant 0 : index
    %33 = vector.load %arg10[%c0_23, %c0_24] : memref<16x8xf32, #tpu.memory_space<vmem>>, vector<16x8xf32>
    tpu.vector_store %arg10[%c0_23, %c0_24], %32 {strides = array<i32>} : memref<16x8xf32, #tpu.memory_space<vmem>>, vector<16x8xf32>,
    return
  }
  func.func @transform_0(%arg0: i32) -> (i32, i32) {
    %c0_i32 = arith.constant 0 : i32
    %c0_i32_0 = arith.constant 0 : i32
    return %arg0, %c0_i32 : i32, i32
  }
  func.func @transform_1(%arg0: i32) -> (i32, i32) {
    %c0_i32 = arith.constant 0 : i32
    %c0_i32_0 = arith.constant 0 : i32
    %c0_i32_1 = arith.constant 0 : i32
    return %c0_i32, %c0_i32_0 : i32, i32
  }
  func.func @transform_2(%arg0: i32) -> (i32, i32) {
    %c0_i32 = arith.constant 0 : i32
    %c0_i32_0 = arith.constant 0 : i32
    %c0_i32_1 = arith.constant 0 : i32
    return %c0_i32, %c0_i32_0 : i32, i32
  }
  func.func @transform_3(%arg0: i32) -> (i32, i32) {
    %c0_i32 = arith.constant 0 : i32
    %c0_i32_0 = arith.constant 0 : i32
    %c0_i32_1 = arith.constant 0 : i32
    return %c0_i32, %c0_i32_0 : i32, i32
  }
  func.func @transform_4(%arg0: i32) -> (i32, i32) {
    %c0_i32 = arith.constant 0 : i32
    %c0_i32_0 = arith.constant 0 : i32
    %c0_i32_1 = arith.constant 0 : i32
    return %c0_i32, %c0_i32_0 : i32, i32
  }
  func.func @transform_5(%arg0: i32) -> (i32, i32) {
    %c0_i32 = arith.constant 0 : i32
    %c0_i32_0 = arith.constant 0 : i32
    %c0_i32_1 = arith.constant 0 : i32
    return %c0_i32, %c0_i32_0 : i32, i32
  }
  func.func @transform_6(%arg0: i32) -> (i32, i32) {
    %c0_i32 = arith.constant 0 : i32
    %c0_i32_0 = arith.constant 0 : i32
    %c0_i32_1 = arith.constant 0 : i32
    return %c0_i32, %c0_i32_0 : i32, i32
  }
  func.func @transform_7(%arg0: i32) -> (i32, i32) {
    %c0_i32 = arith.constant 0 : i32
    %c0_i32_0 = arith.constant 0 : i32
    %c0_i32_1 = arith.constant 0 : i32
    return %c0_i32, %c0_i32_0 : i32, i32
  }
  func.func @transform_8(%arg0: i32) -> (i32, i32) {
    %c0_i32 = arith.constant 0 : i32
    %c0_i32_0 = arith.constant 0 : i32
    %c0_i32_1 = arith.constant 0 : i32
    return %c0_i32, %c0_i32_0 : i32, i32
  }
  func.func @transform_9(%arg0: i32) -> (i32, i32) {
    %c0_i32 = arith.constant 0 : i32
    %c0_i32_0 = arith.constant 0 : i32
    return %arg0, %c0_i32 : i32, i32
  }
}

</mosaic_0001>

<llo_original>
// kernel: tpu_custom_call.1
$region0: #{tpu_custom_call.1}
  #allocation0 [shape = 'u32[]', space=smem, size = 0x4, offset = 0x4, fixed_abs, tag = 'smem constant byte address 0x4 - core index']
  #allocation1 [shape = 'u32[144,128]{1,0:T(1,128)}', space=vmem, size = 0x12000, scoped, tag = 'internal scratch']
  %s0 = inlined_call_operand.vmem [shape: bf16[16,24], index: 0, kind: input, shape index: {}]
  %s1 = inlined_call_operand.hbm [shape: bf16[24,512], index: 1, kind: input, shape index: {}]
  %s2 = inlined_call_operand.vmem [shape: f32[1,512], index: 2, kind: input, shape index: {}]
  %s3 = inlined_call_operand.vmem [shape: bf16[256,256], index: 3, kind: input, shape index: {}]
  %s4 = inlined_call_operand.vmem [shape: f32[1,256], index: 4, kind: input, shape index: {}]
  %s5 = inlined_call_operand.hbm [shape: bf16[256,256], index: 5, kind: input, shape index: {}]
  %s6 = inlined_call_operand.vmem [shape: f32[1,256], index: 6, kind: input, shape index: {}]
  %s7 = inlined_call_operand.vmem [shape: bf16[512,8], index: 7, kind: input, shape index: {}]
  %s8 = inlined_call_operand.vmem [shape: f32[1,8], index: 8, kind: input, shape index: {}]
  %s9 = inlined_call_operand.vmem [shape: f32[16,8], index: 9, kind: output, shape index: {}]
  %s10 = sld [smem:[#allocation0]]
  $region54: #{tpu_custom_call.1} parent=0
    _
  %s12 = ssub.s32 1, %s10
  %s13 = scalar_select 0, %s12, %s10
  $region1: #{tpu_custom_call.1} parent=0
    #allocation2 [shape = 'u8[24576]{0}', space=vmem, size = 0x6000, scoped, tag = 'input window, operand 1, single buffered']
    #allocation3 [shape = 's32[1]{0}', space=sflag, size = 0x4, scoped, tag = 'scoped memory for tpu_custom_call.1']
    #allocation4 [shape = 'u8[131072]{0}', space=vmem, size = 0x20000, scoped, tag = 'input window, operand 5, single buffered']
    #allocation5 [shape = 's32[1]{0}', space=sflag, size = 0x4, scoped, tag = 'scoped memory for tpu_custom_call.1']
    %14 = vsyncpa [#allocation3], 0
    %15 = vsyncpa [#allocation5], 0
    // Predicated region
    $region2: #{tpu_custom_call.1} parent=1 // pred_check
      _
    $region3: #{tpu_custom_call.1} parent=1 // pred_check_branch
      %17 = sbr.rel (0) target = $region5
    $region4: #{tpu_custom_call.1} parent=1 // pred_region
      _
    $region5: #{tpu_custom_call.1} parent=1 // pred_fallthru
      _
    // Predicated region
    $region6: #{tpu_custom_call.1} parent=1 // pred_check
      _
    $region7: #{tpu_custom_call.1} parent=1 // pred_check_branch
      %19 = sbr.rel (0) target = $region9
    $region8: #{tpu_custom_call.1} parent=1 // pred_region
      %s21 = ssub.s32 768, 768
      %22 = vsyncadd [#allocation3], %s21
      %s23 = sshll.u32 [#allocation2], 4
      %s24 = int_to_ptr.vmem [resolvable:$true] %s23
      %29 = dma.hbm_to_vmem [thread:$0]  %s1, 768, %s24, [#allocation3], 256, 256, 16
    $region9: #{tpu_custom_call.1} parent=1 // pred_fallthru
      _
    // Predicated region
    $region10: #{tpu_custom_call.1} parent=1 // pred_check
      _
    $region11: #{tpu_custom_call.1} parent=1 // pred_check_branch
      %31 = sbr.rel (0) target = $region13
    $region12: #{tpu_custom_call.1} parent=1 // pred_region
      _
    $region13: #{tpu_custom_call.1} parent=1 // pred_fallthru
      _
    // Predicated region
    $region14: #{tpu_custom_call.1} parent=1 // pred_check
      _
    $region15: #{tpu_custom_call.1} parent=1 // pred_check_branch
      %33 = sbr.rel (0) target = $region17
    $region16: #{tpu_custom_call.1} parent=1 // pred_region
      _
    $region17: #{tpu_custom_call.1} parent=1 // pred_fallthru
      _
    // Predicated region
    $region18: #{tpu_custom_call.1} parent=1 // pred_check
      _
    $region19: #{tpu_custom_call.1} parent=1 // pred_check_branch
      %35 = sbr.rel (0) target = $region21
    $region20: #{tpu_custom_call.1} parent=1 // pred_region
      _
    $region21: #{tpu_custom_call.1} parent=1 // pred_fallthru
      _
    // Predicated region
    $region22: #{tpu_custom_call.1} parent=1 // pred_check
      _
    $region23: #{tpu_custom_call.1} parent=1 // pred_check_branch
      %37 = sbr.rel (0) target = $region25
    $region24: #{tpu_custom_call.1} parent=1 // pred_region
      %s39 = ssub.s32 4096, 4096
      %40 = vsyncadd [#allocation5], %s39
      %s41 = sshll.u32 [#allocation4], 4
      %s42 = int_to_ptr.vmem [resolvable:$true] %s41
      %47 = dma.hbm_to_vmem [thread:$0]  %s5, 4096, %s42, [#allocation5], 128, 128, 8
    $region25: #{tpu_custom_call.1} parent=1 // pred_fallthru
      _
    // Predicated region
    $region26: #{tpu_custom_call.1} parent=1 // pred_check
      _
    $region27: #{tpu_custom_call.1} parent=1 // pred_check_branch
      %49 = sbr.rel (0) target = $region29
    $region28: #{tpu_custom_call.1} parent=1 // pred_region
      _
    $region29: #{tpu_custom_call.1} parent=1 // pred_fallthru
      _
    // Predicated region
    $region30: #{tpu_custom_call.1} parent=1 // pred_check
      _
    $region31: #{tpu_custom_call.1} parent=1 // pred_check_branch
      %51 = sbr.rel (0) target = $region33
    $region32: #{tpu_custom_call.1} parent=1 // pred_region
      _
    $region33: #{tpu_custom_call.1} parent=1 // pred_fallthru
      _
    // Predicated region
    $region34: #{tpu_custom_call.1} parent=1 // pred_check
      _
    $region35: #{tpu_custom_call.1} parent=1 // pred_check_branch
      %53 = sbr.rel (0) target = $region37
    $region36: #{tpu_custom_call.1} parent=1 // pred_region
      _
    $region37: #{tpu_custom_call.1} parent=1 // pred_fallthru
      _
    // Predicated region
    $region38: #{tpu_custom_call.1} parent=1 // pred_check
      _
    $region39: #{tpu_custom_call.1} parent=1 // pred_check_branch
      %55 = sbr.rel (0) target = $region41
    $region40: #{tpu_custom_call.1} parent=1 // pred_region
      %56 = dma.done [#allocation3], 768
    $region41: #{tpu_custom_call.1} parent=1 // pred_fallthru
      _
    // Predicated region
    $region42: #{tpu_custom_call.1} parent=1 // pred_check
      _
    $region43: #{tpu_custom_call.1} parent=1 // pred_check_branch
      %58 = sbr.rel (0) target = $region45
    $region44: #{tpu_custom_call.1} parent=1 // pred_region
      %59 = dma.done [#allocation5], 4096
    $region45: #{tpu_custom_call.1} parent=1 // pred_fallthru
      _
    %v61 = vld [vmem:[%s0] sm:$0xf]
    %v62 = vld [vmem:[%s0 + $0x4] sm:$0xf]
    %v63 = vld [vmem:[#allocation2] sm:$0xff]
    %v64 = vld [vmem:[#allocation2 + $0x8] sm:$0xff]
    %v65 = vld [vmem:[#allocation2 + $0x10] sm:$0xff]
    %v66 = vld [vmem:[#allocation2 + $0x18] sm:$0xff]
    %v67 = vld [vmem:[#allocation2 + $0x20] sm:$0xff]
    %v68 = vld [vmem:[#allocation2 + $0x28] sm:$0xff]
    %v69 = vld [vmem:[%s2] sm:$0xf]
    %v71 = vlaneseq
    %v72 = vshrl.u32 %v71, 7
    %v73 = vsub.s32 0, %v72
    %v74 = vrot.slane %v69, %v73
    %v75 = vlaneseq
    %v76 = vshrl.u32 %v75, 7
    %v77 = vsub.s32 1, %v76
    %v78 = vrot.slane %v69, %v77
    %v79 = vlaneseq
    %v80 = vshrl.u32 %v79, 7
    %v81 = vsub.s32 2, %v80
    %v82 = vrot.slane %v69, %v81
    %v83 = vlaneseq
    %v84 = vshrl.u32 %v83, 7
    %v85 = vsub.s32 3, %v84
    %v86 = vrot.slane %v69, %v85
    %v93 = vunpack.c.l.b16 %v61
    %v94 = vunpack.c.l.b16 %v62
    %v95 = vpack.c.b16 %v94, %v93
    %v102 = vunpack.c.l.b16 %v63
    %v103 = vunpack.c.h.b16 %v63
    %v104 = vunpack.c.l.b16 %v64
    %v105 = vunpack.c.h.b16 %v64
    %v106 = vunpack.c.l.b16 %v65
    %v107 = vunpack.c.h.b16 %v65
    %v108 = vunpack.c.l.b16 %v66
    %v109 = vunpack.c.h.b16 %v66
    %v110 = vunpack.c.l.b16 %v67
    %v111 = vunpack.c.h.b16 %v67
    %v112 = vunpack.c.l.b16 %v68
    %v113 = vunpack.c.h.b16 %v68
    %v114 = vpack.c.b16 %v106, %v102
    %v115 = vpack.c.b16 %v107, %v103
    %v116 = vpack.c.b16 %v108, %v104
    %v117 = vpack.c.b16 %v109, %v105
    %v118 = vpack.c.b16 %v110, %v110
    %v119 = vpack.c.b16 %v111, %v111
    %v120 = vpack.c.b16 %v112, %v112
    %v121 = vpack.c.b16 %v113, %v113
    %vm126 = vcmask 195584
    %v128 = vsel %vm126, %v95, 0
    %vm130 = vcmask 1043456
    %v132 = vsel %vm130, %v118, 0
    %v135 = vsel %vm130, %v119, 0
    %v138 = vsel %vm130, %v120, 0
    %v141 = vsel %vm130, %v121, 0
    %143 = vmatprep.subr.bf16.mxu0 %v115
    %144 = vmatpush1.bf16.msra.mxu0 %v114
    %145 = vmatprep.subr.bf16.mxu0 %v135
    %146 = vmatpush1.bf16.msra.mxu0 %v132
    %147 = vmatprep.subr.bf16.mxu0 0
    %148 = vmatpush1.bf16.msra.mxu0 0
    %149 = vmatprep.subr.bf16.mxu0 0
    %150 = vmatpush1.bf16.msra.mxu0 0
    %151 = vmatprep.subr.bf16.mxu0 0
    %152 = vmatpush1.bf16.msra.mxu0 0
    %153 = vmatprep.subr.bf16.mxu0 0
    %154 = vmatpush1.bf16.msra.mxu0 0
    %155 = vmatprep.subr.bf16.mxu0 0
    %156 = vmatpush1.bf16.msra.mxu0 0
    %157 = vmatprep.subr.bf16.mxu0 0
    %158 = vmatpush1.bf16.msra.mxu0 0
    %159 = vmatprep.subr.bf16.mxu0 0
    %160 = vmatpush1.bf16.msra.mxu0 0
    %161 = vmatprep.subr.bf16.mxu0 0
    %162 = vmatpush1.bf16.msra.mxu0 0
    %163 = vmatprep.subr.bf16.mxu0 0
    %164 = vmatpush1.bf16.msra.mxu0 0
    %165 = vmatprep.subr.bf16.mxu0 0
    %166 = vmatpush1.bf16.msra.mxu0 0
    %167 = vmatprep.subr.bf16.mxu0 0
    %168 = vmatpush1.bf16.msra.mxu0 0
    %169 = vmatprep.subr.bf16.mxu0 0
    %170 = vmatpush1.bf16.msra.mxu0 0
    %171 = vmatprep.subr.bf16.mxu0 0
    %172 = vmatpush1.bf16.msra.mxu0 0
    %173 = vmatprep.subr.bf16.mxu0 0
    %174 = vmatpush1.bf16.msra.mxu0 0
    %175 = vmatprep.mubr.bf16.mxu0 0
    %176 = vmatmul.mubr.bf16.gmra.mrb[0].mxu0 %v128
    %v177 = vpop.f32.mrb[0].mxu0
    %v178 = vadd.f32 %v74, %v177
    %v179 = vpop.f32.mrb[0].mxu0
    %v180 = vadd.f32 %v78, %v179
    %v181 = vpop.f32.mrb[0].mxu0
    %v182 = vadd.f32 %v74, %v181
    %v183 = vpop.f32.mrb[0].mxu0
    %v184 = vadd.f32 %v78, %v183
    %185 = vdwg.mxu0
    %186 = vmatprep.subr.bf16.mxu0 %v117
    %187 = vmatpush1.bf16.msra.mxu0 %v116
    %188 = vmatprep.subr.bf16.mxu0 %v141
    %189 = vmatpush1.bf16.msra.mxu0 %v138
    %190 = vmatprep.subr.bf16.mxu0 0
    %191 = vmatpush1.bf16.msra.mxu0 0
    %192 = vmatprep.subr.bf16.mxu0 0
    %193 = vmatpush1.bf16.msra.mxu0 0
    %194 = vmatprep.subr.bf16.mxu0 0
    %195 = vmatpush1.bf16.msra.mxu0 0
    %196 = vmatprep.subr.bf16.mxu0 0
    %197 = vmatpush1.bf16.msra.mxu0 0
    %198 = vmatprep.subr.bf16.mxu0 0
    %199 = vmatpush1.bf16.msra.mxu0 0
    %200 = vmatprep.subr.bf16.mxu0 0
    %201 = vmatpush1.bf16.msra.mxu0 0
    %202 = vmatprep.subr.bf16.mxu0 0
    %203 = vmatpush1.bf16.msra.mxu0 0
    %204 = vmatprep.subr.bf16.mxu0 0
    %205 = vmatpush1.bf16.msra.mxu0 0
    %206 = vmatprep.subr.bf16.mxu0 0
    %207 = vmatpush1.bf16.msra.mxu0 0
    %208 = vmatprep.subr.bf16.mxu0 0
    %209 = vmatpush1.bf16.msra.mxu0 0
    %210 = vmatprep.subr.bf16.mxu0 0
    %211 = vmatpush1.bf16.msra.mxu0 0
    %212 = vmatprep.subr.bf16.mxu0 0
    %213 = vmatpush1.bf16.msra.mxu0 0
    %214 = vmatprep.subr.bf16.mxu0 0
    %215 = vmatpush1.bf16.msra.mxu0 0
    %216 = vmatprep.subr.bf16.mxu0 0
    %217 = vmatpush1.bf16.msra.mxu0 0
    %218 = vmatprep.mubr.bf16.mxu0 0
    %219 = vmatmul.mubr.bf16.gmra.mrb[0].mxu0 %v128
    %v220 = vpop.f32.mrb[0].mxu0
    %v221 = vadd.f32 %v82, %v220
    %v222 = vpop.f32.mrb[0].mxu0
    %v223 = vadd.f32 %v86, %v222
    %v224 = vpop.f32.mrb[0].mxu0
    %v225 = vadd.f32 %v82, %v224
    %v226 = vpop.f32.mrb[0].mxu0
    %v227 = vadd.f32 %v86, %v226
    %228 = vdwg.mxu0
    %v229 = vmax.f32 %v178, 0.0
    %v230 = vmax.f32 %v180, 0.0
    %v231 = vmax.f32 %v221, 0.0
    %v232 = vmax.f32 %v223, 0.0
    %v233 = vmax.f32 %v182, 0.0
    %v234 = vmax.f32 %v184, 0.0
    %v235 = vmax.f32 %v225, 0.0
    %v236 = vmax.f32 %v227, 0.0
    %v237 = vpack.c.bf16 %v233, %v229
    %v238 = vpack.c.bf16 %v234, %v230
    %v239 = vpack.c.bf16 %v235, %v231
    %v240 = vpack.c.bf16 %v236, %v232
    %v241 = vld [vmem:[%s3] sm:$0xff]
    %v242 = vld [vmem:[%s3 + $0x8] sm:$0xff]
    %v243 = vld [vmem:[%s3 + $0x10] sm:$0xff]
    %v244 = vld [vmem:[%s3 + $0x18] sm:$0xff]
    %v245 = vld [vmem:[%s3 + $0x20] sm:$0xff]
    %v246 = vld [vmem:[%s3 + $0x28] sm:$0xff]
    %v247 = vld [vmem:[%s3 + $0x30] sm:$0xff]
    %v248 = vld [vmem:[%s3 + $0x38] sm:$0xff]
    %v249 = vld [vmem:[%s3 + $0x40] sm:$0xff]
    %v250 = vld [vmem:[%s3 + $0x48] sm:$0xff]
    %v251 = vld [vmem:[%s3 + $0x50] sm:$0xff]
    %v252 = vld [vmem:[%s3 + $0x58] sm:$0xff]
    %v253 = vld [vmem:[%s3 + $0x60] sm:$0xff]
    %v254 = vld [vmem:[%s3 + $0x68] sm:$0xff]
    %v255 = vld [vmem:[%s3 + $0x70] sm:$0xff]
    %v256 = vld [vmem:[%s3 + $0x78] sm:$0xff]
    %v257 = vld [vmem:[%s3 + $0x80] sm:$0xff]
    %v258 = vld [vmem:[%s3 + $0x88] sm:$0xff]
    %v259 = vld [vmem:[%s3 + $0x90] sm:$0xff]
    %v260 = vld [vmem:[%s3 + $0x98] sm:$0xff]
    %v261 = vld [vmem:[%s3 + $0xa0] sm:$0xff]
    %v262 = vld [vmem:[%s3 + $0xa8] sm:$0xff]
    %v263 = vld [vmem:[%s3 + $0xb0] sm:$0xff]
    %v264 = vld [vmem:[%s3 + $0xb8] sm:$0xff]
    %v265 = vld [vmem:[%s3 + $0xc0] sm:$0xff]
    %v266 = vld [vmem:[%s3 + $0xc8] sm:$0xff]
    %v267 = vld [vmem:[%s3 + $0xd0] sm:$0xff]
    %v268 = vld [vmem:[%s3 + $0xd8] sm:$0xff]
    %v269 = vld [vmem:[%s3 + $0xe0] sm:$0xff]
    %v270 = vld [vmem:[%s3 + $0xe8] sm:$0xff]
    %v271 = vld [vmem:[%s3 + $0xf0] sm:$0xff]
    %v272 = vld [vmem:[%s3 + $0xf8] sm:$0xff]
    %v273 = vld [vmem:[%s4] sm:$0x3]
    %v275 = vlaneseq
    %v276 = vshrl.u32 %v275, 7
    %v277 = vsub.s32 0, %v276
    %v278 = vrot.slane %v273, %v277
    %v279 = vlaneseq
    %v280 = vshrl.u32 %v279, 7
    %v281 = vsub.s32 1, %v280
    %v282 = vrot.slane %v273, %v281
    %v317 = vunpack.c.l.b16 %v241
    %v318 = vunpack.c.h.b16 %v241
    %v319 = vunpack.c.l.b16 %v242
    %v320 = vunpack.c.h.b16 %v242
    %v321 = vunpack.c.l.b16 %v243
    %v322 = vunpack.c.h.b16 %v243
    %v323 = vunpack.c.l.b16 %v244
    %v324 = vunpack.c.h.b16 %v244
    %v325 = vunpack.c.l.b16 %v245
    %v326 = vunpack.c.h.b16 %v245
    %v327 = vunpack.c.l.b16 %v246
    %v328 = vunpack.c.h.b16 %v246
    %v329 = vunpack.c.l.b16 %v247
    %v330 = vunpack.c.h.b16 %v247
    %v331 = vunpack.c.l.b16 %v248
    %v332 = vunpack.c.h.b16 %v248
    %v333 = vunpack.c.l.b16 %v249
    %v334 = vunpack.c.h.b16 %v249
    %v335 = vunpack.c.l.b16 %v250
    %v336 = vunpack.c.h.b16 %v250
    %v337 = vunpack.c.l.b16 %v251
    %v338 = vunpack.c.h.b16 %v251
    %v339 = vunpack.c.l.b16 %v252
    %v340 = vunpack.c.h.b16 %v252
    %v341 = vunpack.c.l.b16 %v253
    %v342 = vunpack.c.h.b16 %v253
    %v343 = vunpack.c.l.b16 %v254
    %v344 = vunpack.c.h.b16 %v254
    %v345 = vunpack.c.l.b16 %v255
    %v346 = vunpack.c.h.b16 %v255
    %v347 = vunpack.c.l.b16 %v256
    %v348 = vunpack.c.h.b16 %v256
    %v349 = vunpack.c.l.b16 %v257
    %v350 = vunpack.c.h.b16 %v257
    %v351 = vunpack.c.l.b16 %v258
    %v352 = vunpack.c.h.b16 %v258
    %v353 = vunpack.c.l.b16 %v259
    %v354 = vunpack.c.h.b16 %v259
    %v355 = vunpack.c.l.b16 %v260
    %v356 = vunpack.c.h.b16 %v260
    %v357 = vunpack.c.l.b16 %v261
    %v358 = vunpack.c.h.b16 %v261
    %v359 = vunpack.c.l.b16 %v262
    %v360 = vunpack.c.h.b16 %v262
    %v361 = vunpack.c.l.b16 %v263
    %v362 = vunpack.c.h.b16 %v263
    %v363 = vunpack.c.l.b16 %v264
    %v364 = vunpack.c.h.b16 %v264
    %v365 = vunpack.c.l.b16 %v265
    %v366 = vunpack.c.h.b16 %v265
    %v367 = vunpack.c.l.b16 %v266
    %v368 = vunpack.c.h.b16 %v266
    %v369 = vunpack.c.l.b16 %v267
    %v370 = vunpack.c.h.b16 %v267
    %v371 = vunpack.c.l.b16 %v268
    %v372 = vunpack.c.h.b16 %v268
    %v373 = vunpack.c.l.b16 %v269
    %v374 = vunpack.c.h.b16 %v269
    %v375 = vunpack.c.l.b16 %v270
    %v376 = vunpack.c.h.b16 %v270
    %v377 = vunpack.c.l.b16 %v271
    %v378 = vunpack.c.h.b16 %v271
    %v379 = vunpack.c.l.b16 %v272
    %v380 = vunpack.c.h.b16 %v272
    %v381 = vpack.c.b16 %v319, %v317
    %v382 = vpack.c.b16 %v320, %v318
    %v383 = vpack.c.b16 %v323, %v321
    %v384 = vpack.c.b16 %v324, %v322
    %v385 = vpack.c.b16 %v327, %v325
    %v386 = vpack.c.b16 %v328, %v326
    %v387 = vpack.c.b16 %v331, %v329
    %v388 = vpack.c.b16 %v332, %v330
    %v389 = vpack.c.b16 %v335, %v333
    %v390 = vpack.c.b16 %v336, %v334
    %v391 = vpack.c.b16 %v339, %v337
    %v392 = vpack.c.b16 %v340, %v338
    %v393 = vpack.c.b16 %v343, %v341
    %v394 = vpack.c.b16 %v344, %v342
    %v395 = vpack.c.b16 %v347, %v345
    %v396 = vpack.c.b16 %v348, %v346
    %v397 = vpack.c.b16 %v351, %v349
    %v398 = vpack.c.b16 %v352, %v350
    %v399 = vpack.c.b16 %v355, %v353
    %v400 = vpack.c.b16 %v356, %v354
    %v401 = vpack.c.b16 %v359, %v357
    %v402 = vpack.c.b16 %v360, %v358
    %v403 = vpack.c.b16 %v363, %v361
    %v404 = vpack.c.b16 %v364, %v362
    %v405 = vpack.c.b16 %v367, %v365
    %v406 = vpack.c.b16 %v368, %v366
    %v407 = vpack.c.b16 %v371, %v369
    %v408 = vpack.c.b16 %v372, %v370
    %v409 = vpack.c.b16 %v375, %v373
    %v410 = vpack.c.b16 %v376, %v374
    %v411 = vpack.c.b16 %v379, %v377
    %v412 = vpack.c.b16 %v380, %v378
    %445 = vmatprep.subr.bf16.mxu0 %v382
    %446 = vmatpush1.bf16.msra.mxu0 %v381
    %447 = vmatprep.subr.bf16.mxu0 %v384
    %448 = vmatpush1.bf16.msra.mxu0 %v383
    %449 = vmatprep.subr.bf16.mxu0 %v386
    %450 = vmatpush1.bf16.msra.mxu0 %v385
    %451 = vmatprep.subr.bf16.mxu0 %v388
    %452 = vmatpush1.bf16.msra.mxu0 %v387
    %453 = vmatprep.subr.bf16.mxu0 %v390
    %454 = vmatpush1.bf16.msra.mxu0 %v389
    %455 = vmatprep.subr.bf16.mxu0 %v392
    %456 = vmatpush1.bf16.msra.mxu0 %v391
    %457 = vmatprep.subr.bf16.mxu0 %v394
    %458 = vmatpush1.bf16.msra.mxu0 %v393
    %459 = vmatprep.subr.bf16.mxu0 %v396
    %460 = vmatpush1.bf16.msra.mxu0 %v395
    %461 = vmatprep.subr.bf16.mxu0 %v398
    %462 = vmatpush1.bf16.msra.mxu0 %v397
    %463 = vmatprep.subr.bf16.mxu0 %v400
    %464 = vmatpush1.bf16.msra.mxu0 %v399
    %465 = vmatprep.subr.bf16.mxu0 %v402
    %466 = vmatpush1.bf16.msra.mxu0 %v401
    %467 = vmatprep.subr.bf16.mxu0 %v404
    %468 = vmatpush1.bf16.msra.mxu0 %v403
    %469 = vmatprep.subr.bf16.mxu0 %v406
    %470 = vmatpush1.bf16.msra.mxu0 %v405
    %471 = vmatprep.subr.bf16.mxu0 %v408
    %472 = vmatpush1.bf16.msra.mxu0 %v407
    %473 = vmatprep.subr.bf16.mxu0 %v410
    %474 = vmatpush1.bf16.msra.mxu0 %v409
    %475 = vmatprep.subr.bf16.mxu0 %v412
    %476 = vmatpush1.bf16.msra.mxu0 %v411
    %477 = vmatprep.mubr.bf16.mxu0 %v238
    %478 = vmatmul.mubr.bf16.gmra.mrb[0].mxu0 %v237
    %v479 = vpop.f32.mrb[0].mxu0
    %v480 = vadd.f32 %v278, %v479
    %v481 = vpop.f32.mrb[0].mxu0
    %v482 = vadd.f32 %v282, %v481
    %v483 = vpop.f32.mrb[0].mxu0
    %v484 = vadd.f32 %v278, %v483
    %v485 = vpop.f32.mrb[0].mxu0
    %v486 = vadd.f32 %v282, %v485
    %487 = vdwg.mxu0
    %v488 = vmax.f32 %v480, 0.0
    %v489 = vmax.f32 %v482, 0.0
    %v490 = vmax.f32 %v484, 0.0
    %v491 = vmax.f32 %v486, 0.0
    %v492 = vpack.c.bf16 %v490, %v488
    %v493 = vpack.c.bf16 %v491, %v489
    %v494 = vld [vmem:[#allocation4] sm:$0xff]
    %v495 = vld [vmem:[#allocation4 + $0x8] sm:$0xff]
    %v496 = vld [vmem:[#allocation4 + $0x10] sm:$0xff]
    %v497 = vld [vmem:[#allocation4 + $0x18] sm:$0xff]
    %v498 = vld [vmem:[#allocation4 + $0x20] sm:$0xff]
    %v499 = vld [vmem:[#allocation4 + $0x28] sm:$0xff]
    %v500 = vld [vmem:[#allocation4 + $0x30] sm:$0xff]
    %v501 = vld [vmem:[#allocation4 + $0x38] sm:$0xff]
    %v502 = vld [vmem:[#allocation4 + $0x40] sm:$0xff]
    %v503 = vld [vmem:[#allocation4 + $0x48] sm:$0xff]
    %v504 = vld [vmem:[#allocation4 + $0x50] sm:$0xff]
    %v505 = vld [vmem:[#allocation4 + $0x58] sm:$0xff]
    %v506 = vld [vmem:[#allocation4 + $0x60] sm:$0xff]
    %v507 = vld [vmem:[#allocation4 + $0x68] sm:$0xff]
    %v508 = vld [vmem:[#allocation4 + $0x70] sm:$0xff]
    %v509 = vld [vmem:[#allocation4 + $0x78] sm:$0xff]
    %v510 = vld [vmem:[#allocation4 + $0x80] sm:$0xff]
    %v511 = vld [vmem:[#allocation4 + $0x88] sm:$0xff]
    %v512 = vld [vmem:[#allocation4 + $0x90] sm:$0xff]
    %v513 = vld [vmem:[#allocation4 + $0x98] sm:$0xff]
    %v514 = vld [vmem:[#allocation4 + $0xa0] sm:$0xff]
    %v515 = vld [vmem:[#allocation4 + $0xa8] sm:$0xff]
    %v516 = vld [vmem:[#allocation4 + $0xb0] sm:$0xff]
    %v517 = vld [vmem:[#allocation4 + $0xb8] sm:$0xff]
    %v518 = vld [vmem:[#allocation4 + $0xc0] sm:$0xff]
    %v519 = vld [vmem:[#allocation4 + $0xc8] sm:$0xff]
    %v520 = vld [vmem:[#allocation4 + $0xd0] sm:$0xff]
    %v521 = vld [vmem:[#allocation4 + $0xd8] sm:$0xff]
    %v522 = vld [vmem:[#allocation4 + $0xe0] sm:$0xff]
    %v523 = vld [vmem:[#allocation4 + $0xe8] sm:$0xff]
    %v524 = vld [vmem:[#allocation4 + $0xf0] sm:$0xff]
    %v525 = vld [vmem:[#allocation4 + $0xf8] sm:$0xff]
    %v526 = vld [vmem:[%s6] sm:$0x3]
    %v528 = vlaneseq
    %v529 = vshrl.u32 %v528, 7
    %v530 = vsub.s32 0, %v529
    %v531 = vrot.slane %v526, %v530
    %v532 = vlaneseq
    %v533 = vshrl.u32 %v532, 7
    %v534 = vsub.s32 1, %v533
    %v535 = vrot.slane %v526, %v534
    %v570 = vunpack.c.l.b16 %v494
    %v571 = vunpack.c.h.b16 %v494
    %v572 = vunpack.c.l.b16 %v495
    %v573 = vunpack.c.h.b16 %v495
    %v574 = vunpack.c.l.b16 %v496
    %v575 = vunpack.c.h.b16 %v496
    %v576 = vunpack.c.l.b16 %v497
    %v577 = vunpack.c.h.b16 %v497
    %v578 = vunpack.c.l.b16 %v498
    %v579 = vunpack.c.h.b16 %v498
    %v580 = vunpack.c.l.b16 %v499
    %v581 = vunpack.c.h.b16 %v499
    %v582 = vunpack.c.l.b16 %v500
    %v583 = vunpack.c.h.b16 %v500
    %v584 = vunpack.c.l.b16 %v501
    %v585 = vunpack.c.h.b16 %v501
    %v586 = vunpack.c.l.b16 %v502
    %v587 = vunpack.c.h.b16 %v502
    %v588 = vunpack.c.l.b16 %v503
    %v589 = vunpack.c.h.b16 %v503
    %v590 = vunpack.c.l.b16 %v504
    %v591 = vunpack.c.h.b16 %v504
    %v592 = vunpack.c.l.b16 %v505
    %v593 = vunpack.c.h.b16 %v505
    %v594 = vunpack.c.l.b16 %v506
    %v595 = vunpack.c.h.b16 %v506
    %v596 = vunpack.c.l.b16 %v507
    %v597 = vunpack.c.h.b16 %v507
    %v598 = vunpack.c.l.b16 %v508
    %v599 = vunpack.c.h.b16 %v508
    %v600 = vunpack.c.l.b16 %v509
    %v601 = vunpack.c.h.b16 %v509
    %v602 = vunpack.c.l.b16 %v510
    %v603 = vunpack.c.h.b16 %v510
    %v604 = vunpack.c.l.b16 %v511
    %v605 = vunpack.c.h.b16 %v511
    %v606 = vunpack.c.l.b16 %v512
    %v607 = vunpack.c.h.b16 %v512
    %v608 = vunpack.c.l.b16 %v513
    %v609 = vunpack.c.h.b16 %v513
    %v610 = vunpack.c.l.b16 %v514
    %v611 = vunpack.c.h.b16 %v514
    %v612 = vunpack.c.l.b16 %v515
    %v613 = vunpack.c.h.b16 %v515
    %v614 = vunpack.c.l.b16 %v516
    %v615 = vunpack.c.h.b16 %v516
    %v616 = vunpack.c.l.b16 %v517
    %v617 = vunpack.c.h.b16 %v517
    %v618 = vunpack.c.l.b16 %v518
    %v619 = vunpack.c.h.b16 %v518
    %v620 = vunpack.c.l.b16 %v519
    %v621 = vunpack.c.h.b16 %v519
    %v622 = vunpack.c.l.b16 %v520
    %v623 = vunpack.c.h.b16 %v520
    %v624 = vunpack.c.l.b16 %v521
    %v625 = vunpack.c.h.b16 %v521
    %v626 = vunpack.c.l.b16 %v522
    %v627 = vunpack.c.h.b16 %v522
    %v628 = vunpack.c.l.b16 %v523
    %v629 = vunpack.c.h.b16 %v523
    %v630 = vunpack.c.l.b16 %v524
    %v631 = vunpack.c.h.b16 %v524
    %v632 = vunpack.c.l.b16 %v525
    %v633 = vunpack.c.h.b16 %v525
    %v634 = vpack.c.b16 %v572, %v570
    %v635 = vpack.c.b16 %v573, %v571
    %v636 = vpack.c.b16 %v576, %v574
    %v637 = vpack.c.b16 %v577, %v575
    %v638 = vpack.c.b16 %v580, %v578
    %v639 = vpack.c.b16 %v581, %v579
    %v640 = vpack.c.b16 %v584, %v582
    %v641 = vpack.c.b16 %v585, %v583
    %v642 = vpack.c.b16 %v588, %v586
    %v643 = vpack.c.b16 %v589, %v587
    %v644 = vpack.c.b16 %v592, %v590
    %v645 = vpack.c.b16 %v593, %v591
    %v646 = vpack.c.b16 %v596, %v594
    %v647 = vpack.c.b16 %v597, %v595
    %v648 = vpack.c.b16 %v600, %v598
    %v649 = vpack.c.b16 %v601, %v599
    %v650 = vpack.c.b16 %v604, %v602
    %v651 = vpack.c.b16 %v605, %v603
    %v652 = vpack.c.b16 %v608, %v606
    %v653 = vpack.c.b16 %v609, %v607
    %v654 = vpack.c.b16 %v612, %v610
    %v655 = vpack.c.b16 %v613, %v611
    %v656 = vpack.c.b16 %v616, %v614
    %v657 = vpack.c.b16 %v617, %v615
    %v658 = vpack.c.b16 %v620, %v618
    %v659 = vpack.c.b16 %v621, %v619
    %v660 = vpack.c.b16 %v624, %v622
    %v661 = vpack.c.b16 %v625, %v623
    %v662 = vpack.c.b16 %v628, %v626
    %v663 = vpack.c.b16 %v629, %v627
    %v664 = vpack.c.b16 %v632, %v630
    %v665 = vpack.c.b16 %v633, %v631
    %698 = vmatprep.subr.bf16.mxu0 %v635
    %699 = vmatpush1.bf16.msra.mxu0 %v634
    %700 = vmatprep.subr.bf16.mxu0 %v637
    %701 = vmatpush1.bf16.msra.mxu0 %v636
    %702 = vmatprep.subr.bf16.mxu0 %v639
    %703 = vmatpush1.bf16.msra.mxu0 %v638
    %704 = vmatprep.subr.bf16.mxu0 %v641
    %705 = vmatpush1.bf16.msra.mxu0 %v640
    %706 = vmatprep.subr.bf16.mxu0 %v643
    %707 = vmatpush1.bf16.msra.mxu0 %v642
    %708 = vmatprep.subr.bf16.mxu0 %v645
    %709 = vmatpush1.bf16.msra.mxu0 %v644
    %710 = vmatprep.subr.bf16.mxu0 %v647
    %711 = vmatpush1.bf16.msra.mxu0 %v646
    %712 = vmatprep.subr.bf16.mxu0 %v649
    %713 = vmatpush1.bf16.msra.mxu0 %v648
    %714 = vmatprep.subr.bf16.mxu0 %v651
    %715 = vmatpush1.bf16.msra.mxu0 %v650
    %716 = vmatprep.subr.bf16.mxu0 %v653
    %717 = vmatpush1.bf16.msra.mxu0 %v652
    %718 = vmatprep.subr.bf16.mxu0 %v655
    %719 = vmatpush1.bf16.msra.mxu0 %v654
    %720 = vmatprep.subr.bf16.mxu0 %v657
    %721 = vmatpush1.bf16.msra.mxu0 %v656
    %722 = vmatprep.subr.bf16.mxu0 %v659
    %723 = vmatpush1.bf16.msra.mxu0 %v658
    %724 = vmatprep.subr.bf16.mxu0 %v661
    %725 = vmatpush1.bf16.msra.mxu0 %v660
    %726 = vmatprep.subr.bf16.mxu0 %v663
    %727 = vmatpush1.bf16.msra.mxu0 %v662
    %728 = vmatprep.subr.bf16.mxu0 %v665
    %729 = vmatpush1.bf16.msra.mxu0 %v664
    %730 = vmatprep.mubr.bf16.mxu0 %v240
    %731 = vmatmul.mubr.bf16.gmra.mrb[0].mxu0 %v239
    %v732 = vpop.f32.mrb[0].mxu0
    %v733 = vadd.f32 %v531, %v732
    %v734 = vpop.f32.mrb[0].mxu0
    %v735 = vadd.f32 %v535, %v734
    %v736 = vpop.f32.mrb[0].mxu0
    %v737 = vadd.f32 %v531, %v736
    %v738 = vpop.f32.mrb[0].mxu0
    %v739 = vadd.f32 %v535, %v738
    %740 = vdwg.mxu0
    %v741 = vmax.f32 %v733, 0.0
    %v742 = vmax.f32 %v735, 0.0
    %v743 = vmax.f32 %v737, 0.0
    %v744 = vmax.f32 %v739, 0.0
    %v745 = vpack.c.bf16 %v743, %v741
    %v746 = vpack.c.bf16 %v744, %v742
    %v747 = vld [vmem:[%s7] sm:$0xf]
    %v748 = vld [vmem:[%s7 + $0x4] sm:$0xf]
    %v749 = vld [vmem:[%s7 + $0x8] sm:$0xf]
    %v750 = vld [vmem:[%s7 + $0xc] sm:$0xf]
    %v751 = vld [vmem:[%s7 + $0x10] sm:$0xf]
    %v752 = vld [vmem:[%s7 + $0x14] sm:$0xf]
    %v753 = vld [vmem:[%s7 + $0x18] sm:$0xf]
    %v754 = vld [vmem:[%s7 + $0x1c] sm:$0xf]
    %v755 = vld [vmem:[%s7 + $0x20] sm:$0xf]
    %v756 = vld [vmem:[%s7 + $0x24] sm:$0xf]
    %v757 = vld [vmem:[%s7 + $0x28] sm:$0xf]
    %v758 = vld [vmem:[%s7 + $0x2c] sm:$0xf]
    %v759 = vld [vmem:[%s7 + $0x30] sm:$0xf]
    %v760 = vld [vmem:[%s7 + $0x34] sm:$0xf]
    %v761 = vld [vmem:[%s7 + $0x38] sm:$0xf]
    %v762 = vld [vmem:[%s7 + $0x3c] sm:$0xf]
    %v763 = vld [vmem:[%s7 + $0x40] sm:$0xf]
    %v764 = vld [vmem:[%s7 + $0x44] sm:$0xf]
    %v765 = vld [vmem:[%s7 + $0x48] sm:$0xf]
    %v766 = vld [vmem:[%s7 + $0x4c] sm:$0xf]
    %v767 = vld [vmem:[%s7 + $0x50] sm:$0xf]
    %v768 = vld [vmem:[%s7 + $0x54] sm:$0xf]
    %v769 = vld [vmem:[%s7 + $0x58] sm:$0xf]
    %v770 = vld [vmem:[%s7 + $0x5c] sm:$0xf]
    %v771 = vld [vmem:[%s7 + $0x60] sm:$0xf]
    %v772 = vld [vmem:[%s7 + $0x64] sm:$0xf]
    %v773 = vld [vmem:[%s7 + $0x68] sm:$0xf]
    %v774 = vld [vmem:[%s7 + $0x6c] sm:$0xf]
    %v775 = vld [vmem:[%s7 + $0x70] sm:$0xf]
    %v776 = vld [vmem:[%s7 + $0x74] sm:$0xf]
    %v777 = vld [vmem:[%s7 + $0x78] sm:$0xf]
    %v778 = vld [vmem:[%s7 + $0x7c] sm:$0xf]
    %v779 = vld [vmem:[%s7 + $0x80] sm:$0xf]
    %v780 = vld [vmem:[%s7 + $0x84] sm:$0xf]
    %v781 = vld [vmem:[%s7 + $0x88] sm:$0xf]
    %v782 = vld [vmem:[%s7 + $0x8c] sm:$0xf]
    %v783 = vld [vmem:[%s7 + $0x90] sm:$0xf]
    %v784 = vld [vmem:[%s7 + $0x94] sm:$0xf]
    %v785 = vld [vmem:[%s7 + $0x98] sm:$0xf]
    %v786 = vld [vmem:[%s7 + $0x9c] sm:$0xf]
    %v787 = vld [vmem:[%s7 + $0xa0] sm:$0xf]
    %v788 = vld [vmem:[%s7 + $0xa4] sm:$0xf]
    %v789 = vld [vmem:[%s7 + $0xa8] sm:$0xf]
    %v790 = vld [vmem:[%s7 + $0xac] sm:$0xf]
    %v791 = vld [vmem:[%s7 + $0xb0] sm:$0xf]
    %v792 = vld [vmem:[%s7 + $0xb4] sm:$0xf]
    %v793 = vld [vmem:[%s7 + $0xb8] sm:$0xf]
    %v794 = vld [vmem:[%s7 + $0xbc] sm:$0xf]
    %v795 = vld [vmem:[%s7 + $0xc0] sm:$0xf]
    %v796 = vld [vmem:[%s7 + $0xc4] sm:$0xf]
    %v797 = vld [vmem:[%s7 + $0xc8] sm:$0xf]
    %v798 = vld [vmem:[%s7 + $0xcc] sm:$0xf]
    %v799 = vld [vmem:[%s7 + $0xd0] sm:$0xf]
    %v800 = vld [vmem:[%s7 + $0xd4] sm:$0xf]
    %v801 = vld [vmem:[%s7 + $0xd8] sm:$0xf]
    %v802 = vld [vmem:[%s7 + $0xdc] sm:$0xf]
    %v803 = vld [vmem:[%s7 + $0xe0] sm:$0xf]
    %v804 = vld [vmem:[%s7 + $0xe4] sm:$0xf]
    %v805 = vld [vmem:[%s7 + $0xe8] sm:$0xf]
    %v806 = vld [vmem:[%s7 + $0xec] sm:$0xf]
    %v807 = vld [vmem:[%s7 + $0xf0] sm:$0xf]
    %v808 = vld [vmem:[%s7 + $0xf4] sm:$0xf]
    %v809 = vld [vmem:[%s7 + $0xf8] sm:$0xf]
    %v810 = vld [vmem:[%s7 + $0xfc] sm:$0xf]
    %v811 = vld [vmem:[%s8] sm:$0x1]
    %v813 = vlaneseq
    %v814 = vshrl.u32 %v813, 7
    %v815 = vsub.s32 0, %v814
    %v816 = vrot.slane %v811, %v815
    %v882 = vunpack.c.l.b16 %v747
    %v883 = vunpack.c.l.b16 %v748
    %v884 = vunpack.c.l.b16 %v749
    %v885 = vunpack.c.l.b16 %v750
    %v886 = vunpack.c.l.b16 %v751
    %v887 = vunpack.c.l.b16 %v752
    %v888 = vunpack.c.l.b16 %v753
    %v889 = vunpack.c.l.b16 %v754
    %v890 = vunpack.c.l.b16 %v755
    %v891 = vunpack.c.l.b16 %v756
    %v892 = vunpack.c.l.b16 %v757
    %v893 = vunpack.c.l.b16 %v758
    %v894 = vunpack.c.l.b16 %v759
    %v895 = vunpack.c.l.b16 %v760
    %v896 = vunpack.c.l.b16 %v761
    %v897 = vunpack.c.l.b16 %v762
    %v898 = vunpack.c.l.b16 %v763
    %v899 = vunpack.c.l.b16 %v764
    %v900 = vunpack.c.l.b16 %v765
    %v901 = vunpack.c.l.b16 %v766
    %v902 = vunpack.c.l.b16 %v767
    %v903 = vunpack.c.l.b16 %v768
    %v904 = vunpack.c.l.b16 %v769
    %v905 = vunpack.c.l.b16 %v770
    %v906 = vunpack.c.l.b16 %v771
    %v907 = vunpack.c.l.b16 %v772
    %v908 = vunpack.c.l.b16 %v773
    %v909 = vunpack.c.l.b16 %v774
    %v910 = vunpack.c.l.b16 %v775
    %v911 = vunpack.c.l.b16 %v776
    %v912 = vunpack.c.l.b16 %v777
    %v913 = vunpack.c.l.b16 %v778
    %v914 = vunpack.c.l.b16 %v779
    %v915 = vunpack.c.l.b16 %v780
    %v916 = vunpack.c.l.b16 %v781
    %v917 = vunpack.c.l.b16 %v782
    %v918 = vunpack.c.l.b16 %v783
    %v919 = vunpack.c.l.b16 %v784
    %v920 = vunpack.c.l.b16 %v785
    %v921 = vunpack.c.l.b16 %v786
    %v922 = vunpack.c.l.b16 %v787
    %v923 = vunpack.c.l.b16 %v788
    %v924 = vunpack.c.l.b16 %v789
    %v925 = vunpack.c.l.b16 %v790
    %v926 = vunpack.c.l.b16 %v791
    %v927 = vunpack.c.l.b16 %v792
    %v928 = vunpack.c.l.b16 %v793
    %v929 = vunpack.c.l.b16 %v794
    %v930 = vunpack.c.l.b16 %v795
    %v931 = vunpack.c.l.b16 %v796
    %v932 = vunpack.c.l.b16 %v797
    %v933 = vunpack.c.l.b16 %v798
    %v934 = vunpack.c.l.b16 %v799
    %v935 = vunpack.c.l.b16 %v800
    %v936 = vunpack.c.l.b16 %v801
    %v937 = vunpack.c.l.b16 %v802
    %v938 = vunpack.c.l.b16 %v803
    %v939 = vunpack.c.l.b16 %v804
    %v940 = vunpack.c.l.b16 %v805
    %v941 = vunpack.c.l.b16 %v806
    %v942 = vunpack.c.l.b16 %v807
    %v943 = vunpack.c.l.b16 %v808
    %v944 = vunpack.c.l.b16 %v809
    %v945 = vunpack.c.l.b16 %v810
    %v946 = vpack.c.b16 %v883, %v882
    %v947 = vpack.c.b16 %v885, %v884
    %v948 = vpack.c.b16 %v887, %v886
    %v949 = vpack.c.b16 %v889, %v888
    %v950 = vpack.c.b16 %v891, %v890
    %v951 = vpack.c.b16 %v893, %v892
    %v952 = vpack.c.b16 %v895, %v894
    %v953 = vpack.c.b16 %v897, %v896
    %v954 = vpack.c.b16 %v899, %v898
    %v955 = vpack.c.b16 %v901, %v900
    %v956 = vpack.c.b16 %v903, %v902
    %v957 = vpack.c.b16 %v905, %v904
    %v958 = vpack.c.b16 %v907, %v906
    %v959 = vpack.c.b16 %v909, %v908
    %v960 = vpack.c.b16 %v911, %v910
    %v961 = vpack.c.b16 %v913, %v912
    %v962 = vpack.c.b16 %v915, %v914
    %v963 = vpack.c.b16 %v917, %v916
    %v964 = vpack.c.b16 %v919, %v918
    %v965 = vpack.c.b16 %v921, %v920
    %v966 = vpack.c.b16 %v923, %v922
    %v967 = vpack.c.b16 %v925, %v924
    %v968 = vpack.c.b16 %v927, %v926
    %v969 = vpack.c.b16 %v929, %v928
    %v970 = vpack.c.b16 %v931, %v930
    %v971 = vpack.c.b16 %v933, %v932
    %v972 = vpack.c.b16 %v935, %v934
    %v973 = vpack.c.b16 %v937, %v936
    %v974 = vpack.c.b16 %v939, %v938
    %v975 = vpack.c.b16 %v941, %v940
    %v976 = vpack.c.b16 %v943, %v942
    %v977 = vpack.c.b16 %v945, %v944
    %1010 = vmatprep.subr.bf16.mxu0 0
    %1011 = vmatpush1.bf16.msra.mxu0 %v946
    %1012 = vmatprep.subr.bf16.mxu0 0
    %1013 = vmatpush1.bf16.msra.mxu0 %v947
    %1014 = vmatprep.subr.bf16.mxu0 0
    %1015 = vmatpush1.bf16.msra.mxu0 %v948
    %1016 = vmatprep.subr.bf16.mxu0 0
    %1017 = vmatpush1.bf16.msra.mxu0 %v949
    %1018 = vmatprep.subr.bf16.mxu0 0
    %1019 = vmatpush1.bf16.msra.mxu0 %v950
    %1020 = vmatprep.subr.bf16.mxu0 0
    %1021 = vmatpush1.bf16.msra.mxu0 %v951
    %1022 = vmatprep.subr.bf16.mxu0 0
    %1023 = vmatpush1.bf16.msra.mxu0 %v952
    %1024 = vmatprep.subr.bf16.mxu0 0
    %1025 = vmatpush1.bf16.msra.mxu0 %v953
    %1026 = vmatprep.subr.bf16.mxu0 0
    %1027 = vmatpush1.bf16.msra.mxu0 %v954
    %1028 = vmatprep.subr.bf16.mxu0 0
    %1029 = vmatpush1.bf16.msra.mxu0 %v955
    %1030 = vmatprep.subr.bf16.mxu0 0
    %1031 = vmatpush1.bf16.msra.mxu0 %v956
    %1032 = vmatprep.subr.bf16.mxu0 0
    %1033 = vmatpush1.bf16.msra.mxu0 %v957
    %1034 = vmatprep.subr.bf16.mxu0 0
    %1035 = vmatpush1.bf16.msra.mxu0 %v958
    %1036 = vmatprep.subr.bf16.mxu0 0
    %1037 = vmatpush1.bf16.msra.mxu0 %v959
    %1038 = vmatprep.subr.bf16.mxu0 0
    %1039 = vmatpush1.bf16.msra.mxu0 %v960
    %1040 = vmatprep.subr.bf16.mxu0 0
    %1041 = vmatpush1.bf16.msra.mxu0 %v961
    %1042 = vmatprep.mubr.bf16.mxu0 %v493
    %1043 = vmatmul.mubr.bf16.gmra.mrb[0].mxu0 %v492
    %v1044 = vpop.f32.mrb[0].mxu0
    %v1045 = vadd.f32 %v816, %v1044
    %v1046 = vpop.f32.mrb[0].mxu0
    %v1047 = vpop.f32.mrb[0].mxu0
    %v1048 = vadd.f32 %v816, %v1047
    %v1049 = vpop.f32.mrb[0].mxu0
    %1050 = vdwg.mxu0
    %1051 = vmatprep.subr.bf16.mxu0 0
    %1052 = vmatpush1.bf16.msra.mxu0 %v962
    %1053 = vmatprep.subr.bf16.mxu0 0
    %1054 = vmatpush1.bf16.msra.mxu0 %v963
    %1055 = vmatprep.subr.bf16.mxu0 0
    %1056 = vmatpush1.bf16.msra.mxu0 %v964
    %1057 = vmatprep.subr.bf16.mxu0 0
    %1058 = vmatpush1.bf16.msra.mxu0 %v965
    %1059 = vmatprep.subr.bf16.mxu0 0
    %1060 = vmatpush1.bf16.msra.mxu0 %v966
    %1061 = vmatprep.subr.bf16.mxu0 0
    %1062 = vmatpush1.bf16.msra.mxu0 %v967
    %1063 = vmatprep.subr.bf16.mxu0 0
    %1064 = vmatpush1.bf16.msra.mxu0 %v968
    %1065 = vmatprep.subr.bf16.mxu0 0
    %1066 = vmatpush1.bf16.msra.mxu0 %v969
    %1067 = vmatprep.subr.bf16.mxu0 0
    %1068 = vmatpush1.bf16.msra.mxu0 %v970
    %1069 = vmatprep.subr.bf16.mxu0 0
    %1070 = vmatpush1.bf16.msra.mxu0 %v971
    %1071 = vmatprep.subr.bf16.mxu0 0
    %1072 = vmatpush1.bf16.msra.mxu0 %v972
    %1073 = vmatprep.subr.bf16.mxu0 0
    %1074 = vmatpush1.bf16.msra.mxu0 %v973
    %1075 = vmatprep.subr.bf16.mxu0 0
    %1076 = vmatpush1.bf16.msra.mxu0 %v974
    %1077 = vmatprep.subr.bf16.mxu0 0
    %1078 = vmatpush1.bf16.msra.mxu0 %v975
    %1079 = vmatprep.subr.bf16.mxu0 0
    %1080 = vmatpush1.bf16.msra.mxu0 %v976
    %1081 = vmatprep.subr.bf16.mxu0 0
    %1082 = vmatpush1.bf16.msra.mxu0 %v977
    %1083 = vmatprep.mubr.bf16.mxu0 %v746
    %1084 = vmatmul.mubr.bf16.gmra.mrb[0].mxu0 %v745
    %v1085 = vpop.f32.mrb[0].mxu0
    %v1086 = vadd.f32 %v1045, %v1085
    %v1087 = vpop.f32.mrb[0].mxu0
    %v1088 = vpop.f32.mrb[0].mxu0
    %v1089 = vadd.f32 %v1048, %v1088
    %v1090 = vpop.f32.mrb[0].mxu0
    %1091 = vdwg.mxu0
    %vm1092 = vcmask 64512
    %1093 = vst.msk [vmem:[%s9] sm:$0xff] %vm1092, %v1086
    %1094 = vst.msk [vmem:[%s9 + $0x8] sm:$0xff] %vm1092, %v1089
    // Predicated region
    $region46: #{tpu_custom_call.1} parent=1 // pred_check
      _
    $region47: #{tpu_custom_call.1} parent=1 // pred_check_branch
      %1096 = sbr.rel (0) target = $region49
    $region48: #{tpu_custom_call.1} parent=1 // pred_region
      _
    $region49: #{tpu_custom_call.1} parent=1 // pred_fallthru
      _
    // Predicated region
    $region50: #{tpu_custom_call.1} parent=1 // pred_check
      _
    $region51: #{tpu_custom_call.1} parent=1 // pred_check_branch
      %1098 = sbr.rel (0) target = $region53
    $region52: #{tpu_custom_call.1} parent=1 // pred_region
      _
    $region53: #{tpu_custom_call.1} parent=1 // pred_fallthru
      _
    %1099 = vsyncpa [#allocation3], 1
    %1100 = vsyncpa [#allocation5], 1

</llo_original>
